<compile_context>
chip_gen: v7x
topology: tpu7x:2x2x1
jax: 0.10.0
libtpu: 0.0.40
codegen_flags: <defaults>
</compile_context>

<pallas_src>
import jax
import jax.numpy as jnp
from jax.experimental import pallas as pl
from jax.experimental.pallas import tpu as pltpu


INPUT_SIZE = 14 * 14          # 196
HIDDEN = 50
OUT = 2
K_PAD = 512                   # 2*196 = 392 -> 512 (4 * 128 lanes)
H_PAD = 128                   # 2*50  = 100 -> 128
O_PAD = 128                   # 2     ->      128 (lane-dense output)


def _siamese_kernel(x_ref, w1_ref, w2_ref, w3_ref, b_ref, out_ref):
    """x:[TB,512]f32  w1:[512,128]bf16  w2:[128,128]bf16  w3:[128,128]bf16
    b:[1,128]f32  out:[TB,128] — one fused block-diagonal MLP chain."""
    f32 = jnp.float32
    cdt = w1_ref.dtype

    # f32 -> bf16 cast inside the kernel: hidden under the weight DMA.
    x = x_ref[...].astype(cdt)
    h = jnp.dot(x, w1_ref[...], preferred_element_type=f32)            # MXU
    h = jnp.maximum(h, 0.0)                                            # f32 VPU
    h = jnp.dot(h.astype(cdt), w2_ref[...], preferred_element_type=f32)
    h = jnp.maximum(h, 0.0)
    logits = jnp.dot(h.astype(cdt), w3_ref[...], preferred_element_type=f32)
    out_ref[...] = (logits + b_ref[...]).astype(out_ref.dtype)          # f32 bias add


def pack_params(params, compute_dtype=jnp.bfloat16):
    """Fuse fcout into the branch heads, build block-diagonal padded weights,
    and cast the MXU operands to bf16 (bias stays f32). Done once, offline."""
    # Fused heads: cat order is (fc_seq1 out, fc_seq2 out) -> wout rows [0:2], [2:4]
    w3a_f = params["w3a"] @ params["wout"][0:2]      # [50, 2]
    w3b_f = params["w3b"] @ params["wout"][2:4]      # [50, 2]

    w1 = jnp.zeros((K_PAD, H_PAD), jnp.float32)
    w1 = w1.at[0:INPUT_SIZE, 0:HIDDEN].set(params["w1a"])
    w1 = w1.at[INPUT_SIZE:2 * INPUT_SIZE, HIDDEN:2 * HIDDEN].set(params["w1b"])

    w2 = jnp.zeros((H_PAD, H_PAD), jnp.float32)
    w2 = w2.at[0:HIDDEN, 0:HIDDEN].set(params["w2a"])
    w2 = w2.at[HIDDEN:2 * HIDDEN, HIDDEN:2 * HIDDEN].set(params["w2b"])

    w3 = jnp.zeros((H_PAD, O_PAD), jnp.float32)
    w3 = w3.at[0:HIDDEN, 0:OUT].set(w3a_f)
    w3 = w3.at[HIDDEN:2 * HIDDEN, 0:OUT].set(w3b_f)

    b = jnp.zeros((1, O_PAD), jnp.float32)
    b = b.at[:, 0:OUT].set(params["bout"])

    return {
        "w1": w1.astype(compute_dtype),
        "w2": w2.astype(compute_dtype),
        "w3": w3.astype(compute_dtype),
        "b": b,                                   # f32: bias add on VPU in f32
    }


def siamese_no_sharing_forward(x, packed, *, tb=None):
    """x: [B, 2, 14, 14] float32.  packed: output of pack_params().

    tb=None  -> gridless path (best for small B; weights + x + out ~200 KB).
    tb=int   -> 1-D grid over the batch with tile size tb (use for B >~ 512):
                x/out double-buffered, weights VMEM-resident, "parallel" axis
                shards B tiles across v7x's 2 TensorCores, bf16 output tile.
    """
    B = x.shape[0]

    # Single fused pack: contiguous [x1 | x2] comes straight from reshape;
    # one pad handles both lane padding (392->512) and sublane/tile padding.
    if tb is None:
        b_pad = -(-B // 8) * 8                      # round up to full sublane group
    else:
        b_pad = -(-B // tb) * tb                    # round up to a whole B tile
    xp = jnp.pad(x.reshape(B, 2 * INPUT_SIZE).astype(jnp.float32),
                 ((0, b_pad - B), (0, K_PAD - 2 * INPUT_SIZE)))

    if tb is None:
        # Gridless: every operand is one whole-array VMEM block.
        vmem = pl.BlockSpec(memory_space=pltpu.MemorySpace.VMEM)
        out_padded = pl.pallas_call(
            _siamese_kernel,
            out_shape=jax.ShapeDtypeStruct((b_pad, O_PAD), jnp.float32),
            in_specs=[vmem, vmem, vmem, vmem, vmem],
            out_specs=vmem,
        )(xp, packed["w1"], packed["w2"], packed["w3"], packed["b"])
        return out_padded[:B, :OUT]

    # Gridded large-batch path.
    grid = (b_pad // tb,)
    out_padded = pl.pallas_call(
        _siamese_kernel,
        out_shape=jax.ShapeDtypeStruct((b_pad, O_PAD), jnp.bfloat16),
        grid=grid,
        in_specs=[
            pl.BlockSpec((tb, K_PAD), lambda i: (i, 0)),        # x tile (double-buffered)
            pl.BlockSpec((K_PAD, H_PAD), lambda i: (0, 0)),     # weights: constant block
            pl.BlockSpec((H_PAD, H_PAD), lambda i: (0, 0)),     #  -> DMA'd once, resident
            pl.BlockSpec((H_PAD, O_PAD), lambda i: (0, 0)),
            pl.BlockSpec((1, O_PAD), lambda i: (0, 0)),
        ],
        out_specs=pl.BlockSpec((tb, O_PAD), lambda i: (i, 0)),
        compiler_params=pltpu.CompilerParams(
            dimension_semantics=("parallel",)),                  # 2 TCs on v7x
    )(xp, packed["w1"], packed["w2"], packed["w3"], packed["b"])
    return out_padded[:B, :OUT].astype(jnp.float32)


def init_params(key):
    """Deterministic init mimicking nn.Linear's uniform(-1/sqrt(in), 1/sqrt(in)).
    Weights stored transposed ([in, out]) relative to PyTorch."""
    def linear_w(k, fan_in, fan_out):
        bound = 1.0 / jnp.sqrt(jnp.float32(fan_in))
        return jax.random.uniform(k, (fan_in, fan_out), jnp.float32,
                                  minval=-bound, maxval=bound)

    keys = jax.random.split(key, 8)
    bound_out = 1.0 / jnp.sqrt(jnp.float32(2 * OUT))
    return {
        # fc_seq1 (applied to x[:, 0])
        "w1a": linear_w(keys[0], INPUT_SIZE, HIDDEN),
        "w2a": linear_w(keys[1], HIDDEN, HIDDEN),
        "w3a": linear_w(keys[2], HIDDEN, OUT),
        # fc_seq2 (applied to x[:, 1])
        "w1b": linear_w(keys[3], INPUT_SIZE, HIDDEN),
        "w2b": linear_w(keys[4], HIDDEN, HIDDEN),
        "w3b": linear_w(keys[5], HIDDEN, OUT),
        # fcout: Linear(4 -> 2) with bias
        "wout": linear_w(keys[6], 2 * OUT, OUT),
        "bout": jax.random.uniform(keys[7], (1, OUT), jnp.float32,
                                   minval=-bound_out, maxval=bound_out),
    }


def reference_forward(x, params):
    """Pure-JAX f32 reference of the original PyTorch module."""
    B = x.shape[0]
    x1 = x[:, 0].reshape(B, -1)
    x2 = x[:, 1].reshape(B, -1)

    def branch(v, w1, w2, w3):
        v = jnp.maximum(v @ w1, 0.0)
        v = jnp.maximum(v @ w2, 0.0)
        return v @ w3

    o1 = branch(x1, params["w1a"], params["w2a"], params["w3a"])
    o2 = branch(x2, params["w1b"], params["w2b"], params["w3b"])
    cat = jnp.concatenate([o1, o2], axis=1)
    return cat @ params["wout"] + params["bout"]


if __name__ == "__main__":
    key = jax.random.PRNGKey(0)
    k_x, k_p, k_xl = jax.random.split(key, 3)

    params = init_params(k_p)
    packed = pack_params(params)          # offline fuse + pad + bf16 cast

    # Small-batch (gridless) path.
    B = 2
    x = jax.random.normal(k_x, (B, 2, 14, 14), dtype=jnp.float32)
    logits = jax.block_until_ready(siamese_no_sharing_forward(x, packed))
    ref = reference_forward(x, params)
    assert logits.shape == (B, 2), logits.shape
    # Tolerance loosened for bf16 MXU operands (f32 accumulation).
    assert jnp.allclose(logits, ref, atol=5e-2, rtol=5e-2), (logits, ref)

    # Large-batch (gridded, weights-resident, parallel-axis) path.
    BL = 1000                              # deliberately not a multiple of tb
    xl = jax.random.normal(k_xl, (BL, 2, 14, 14), dtype=jnp.float32)
    logits_l = jax.block_until_ready(
        siamese_no_sharing_forward(xl, packed, tb=256))
    ref_l = reference_forward(xl, params)
    assert logits_l.shape == (BL, 2), logits_l.shape
    assert jnp.allclose(logits_l, ref_l, atol=5e-2, rtol=5e-2)

    print("KERNEL_OK")
</pallas_src>

<mosaic_0001>
module attributes {stable_mosaic.version = 11 : i64} {
  func.func @_siamese_kernel(%arg0: memref<8x512xf32, #tpu.memory_space<vmem>>, %arg1: memref<512x128xbf16, #tpu.memory_space<vmem>>, %arg2: memref<128x128xbf16, #tpu.memory_space<vmem>>, %arg3: memref<128x128xbf16, #tpu.memory_space<vmem>>, %arg4: memref<1x128xf32, #tpu.memory_space<vmem>>, %arg5: memref<8x128xf32, #tpu.memory_space<vmem>>) attributes {dimension_semantics = [], scalar_prefetch = 0 : i64, scratch_operands = 0 : i64, tpu.core_type = #tpu.core_type<tc>} {
    %c0 = arith.constant 0 : index
    %c0_0 = arith.constant 0 : index
    %0 = vector.load %arg0[%c0, %c0_0] : memref<8x512xf32, #tpu.memory_space<vmem>>, vector<8x512xf32>
    %1 = arith.truncf %0 : vector<8x512xf32> to vector<8x512xbf16>
    %c0_1 = arith.constant 0 : index
    %c0_2 = arith.constant 0 : index
    %2 = vector.load %arg1[%c0_1, %c0_2] : memref<512x128xbf16, #tpu.memory_space<vmem>>, vector<512x128xbf16>
    %cst = arith.constant dense<0.000000e+00> : vector<8x128xf32>
    %3 = tpu.matmul %1, %2, %cst {dimension_numbers = #tpu.dot_dimension_numbers<[1], [0], [0], [1], [0, 0, 1, 1], [], []>} : vector<8x512xbf16>, vector<512x128xbf16>, vector<8x128xf32> -> vector<8x128xf32>
    %cst_3 = arith.constant 0.000000e+00 : f32
    %4 = vector.broadcast %cst_3 : f32 to vector<8x128xf32>
    %5 = arith.maximumf %3, %4 : vector<8x128xf32>
    %6 = arith.truncf %5 : vector<8x128xf32> to vector<8x128xbf16>
    %c0_4 = arith.constant 0 : index
    %c0_5 = arith.constant 0 : index
    %7 = vector.load %arg2[%c0_4, %c0_5] : memref<128x128xbf16, #tpu.memory_space<vmem>>, vector<128x128xbf16>
    %cst_6 = arith.constant dense<0.000000e+00> : vector<8x128xf32>
    %8 = tpu.matmul %6, %7, %cst_6 {dimension_numbers = #tpu.dot_dimension_numbers<[1], [0], [0], [1], [0, 0, 1, 1], [], []>} : vector<8x128xbf16>, vector<128x128xbf16>, vector<8x128xf32> -> vector<8x128xf32>
    %cst_7 = arith.constant 0.000000e+00 : f32
    %9 = vector.broadcast %cst_7 : f32 to vector<8x128xf32>
    %10 = arith.maximumf %8, %9 : vector<8x128xf32>
    %11 = arith.truncf %10 : vector<8x128xf32> to vector<8x128xbf16>
    %c0_8 = arith.constant 0 : index
    %c0_9 = arith.constant 0 : index
    %12 = vector.load %arg3[%c0_8, %c0_9] : memref<128x128xbf16, #tpu.memory_space<vmem>>, vector<128x128xbf16>
    %cst_10 = arith.constant dense<0.000000e+00> : vector<8x128xf32>
    %13 = tpu.matmul %11, %12, %cst_10 {dimension_numbers = #tpu.dot_dimension_numbers<[1], [0], [0], [1], [0, 0, 1, 1], [], []>} : vector<8x128xbf16>, vector<128x128xbf16>, vector<8x128xf32> -> vector<8x128xf32>
    %c0_11 = arith.constant 0 : index
    %c0_12 = arith.constant 0 : index
    %14 = vector.load %arg4[%c0_11, %c0_12] : memref<1x128xf32, #tpu.memory_space<vmem>>, vector<1x128xf32>
    %15 = vector.broadcast %14 : vector<1x128xf32> to vector<8x128xf32>
    %16 = arith.addf %13, %15 : vector<8x128xf32>
    %c0_13 = arith.constant 0 : index
    %c0_14 = arith.constant 0 : index
    %17 = vector.load %arg5[%c0_13, %c0_14] : memref<8x128xf32, #tpu.memory_space<vmem>>, vector<8x128xf32>
    tpu.vector_store %arg5[%c0_13, %c0_14], %16 {strides = array<i32>} : memref<8x128xf32, #tpu.memory_space<vmem>>, vector<8x128xf32>,
    return
  }
}

</mosaic_0001>

<llo_original>
// kernel: tpu_custom_call.1
$region0: #{tpu_custom_call.1}
  #allocation0 [shape = 'u32[]', space=smem, size = 0x4, offset = 0x4, fixed_abs, tag = 'smem constant byte address 0x4 - core index']
  #allocation1 [shape = 'u32[144,128]{1,0:T(1,128)}', space=vmem, size = 0x12000, scoped, tag = 'internal scratch']
  %s0 = inlined_call_operand.hbm [shape: f32[8,512], index: 0, kind: input, shape index: {}]
  %s1 = inlined_call_operand.hbm [shape: bf16[512,128], index: 1, kind: input, shape index: {}]
  %s2 = inlined_call_operand.hbm [shape: bf16[128,128], index: 2, kind: input, shape index: {}]
  %s3 = inlined_call_operand.hbm [shape: bf16[128,128], index: 3, kind: input, shape index: {}]
  %s4 = inlined_call_operand.vmem [shape: f32[1,128], index: 4, kind: input, shape index: {}]
  %s5 = inlined_call_operand.hbm [shape: f32[8,128], index: 5, kind: output, shape index: {}]
  %s6 = sld [smem:[#allocation0]]
  $region46: #{tpu_custom_call.1} parent=0
    _
  %s8 = ssub.s32 1, %s6
  %s9 = scalar_select 0, %s8, %s6
  $region1: #{tpu_custom_call.1} parent=0
    #allocation2 [shape = 'u8[16384]{0}', space=vmem, size = 0x4000, scoped, tag = 'input window, operand 0, single buffered']
    #allocation3 [shape = 's32[1]{0}', space=sflag, size = 0x4, scoped, tag = 'scoped memory for tpu_custom_call.1']
    #allocation4 [shape = 's32[1]{0}', space=sflag, size = 0x4, scoped, tag = 'scoped memory for tpu_custom_call.1']
    #allocation5 [shape = 'u8[131072]{0}', space=vmem, size = 0x20000, scoped, tag = 'input window, operand 1, single buffered']
    #allocation6 [shape = 's32[1]{0}', space=sflag, size = 0x4, scoped, tag = 'scoped memory for tpu_custom_call.1']
    #allocation7 [shape = 'u8[32768]{0}', space=vmem, size = 0x8000, scoped, tag = 'input window, operand 2, single buffered']
    #allocation8 [shape = 'u8[32768]{0}', space=vmem, size = 0x8000, scoped, tag = 'input window, operand 3, single buffered']
    #allocation9 [shape = 's32[1]{0}', space=sflag, size = 0x4, scoped, tag = 'scoped memory for tpu_custom_call.1']
    #allocation10 [shape = 'u8[4096]{0}', space=vmem, size = 0x1000, scoped, tag = 'output window, operand 0, single buffered']
    %10 = vsyncpa [#allocation3], 0
    %11 = vsyncpa [#allocation6], 0
    %12 = vsyncpa [#allocation9], 0
    %13 = vsyncpa [#allocation4], 0
    // Predicated region
    $region2: #{tpu_custom_call.1} parent=1 // pred_check
      _
    $region3: #{tpu_custom_call.1} parent=1 // pred_check_branch
      %15 = sbr.rel (0) target = $region5
    $region4: #{tpu_custom_call.1} parent=1 // pred_region
      %s17 = ssub.s32 512, 512
      %18 = vsyncadd [#allocation3], %s17
      %s20 = sshll.u32 [#allocation2], 4
      %s21 = int_to_ptr.vmem [resolvable:$true] %s20
      %23 = dma.hbm_to_vmem [thread:$0]  %s0, 512, %s21, [#allocation3]
    $region5: #{tpu_custom_call.1} parent=1 // pred_fallthru
      _
    // Predicated region
    $region6: #{tpu_custom_call.1} parent=1 // pred_check
      _
    $region7: #{tpu_custom_call.1} parent=1 // pred_check_branch
      %25 = sbr.rel (0) target = $region9
    $region8: #{tpu_custom_call.1} parent=1 // pred_region
      %s27 = ssub.s32 4096, 4096
      %28 = vsyncadd [#allocation6], %s27
      %s29 = sshll.u32 [#allocation5], 4
      %s30 = int_to_ptr.vmem [resolvable:$true] %s29
      %35 = dma.hbm_to_vmem [thread:$0]  %s1, 4096, %s30, [#allocation6], 64, 64, 4
    $region9: #{tpu_custom_call.1} parent=1 // pred_fallthru
      _
    // Predicated region
    $region10: #{tpu_custom_call.1} parent=1 // pred_check
      _
    $region11: #{tpu_custom_call.1} parent=1 // pred_check_branch
      %37 = sbr.rel (0) target = $region13
    $region12: #{tpu_custom_call.1} parent=1 // pred_region
      %s39 = ssub.s32 1024, 1024
      %40 = vsyncadd [#allocation6], %s39
      %s41 = sshll.u32 [#allocation7], 4
      %s42 = int_to_ptr.vmem [resolvable:$true] %s41
      %47 = dma.hbm_to_vmem [thread:$0]  %s2, 1024, %s42, [#allocation6], 64, 64, 4
    $region13: #{tpu_custom_call.1} parent=1 // pred_fallthru
      _
    // Predicated region
    $region14: #{tpu_custom_call.1} parent=1 // pred_check
      _
    $region15: #{tpu_custom_call.1} parent=1 // pred_check_branch
      %49 = sbr.rel (0) target = $region17
    $region16: #{tpu_custom_call.1} parent=1 // pred_region
      %s51 = ssub.s32 1024, 1024
      %52 = vsyncadd [#allocation9], %s51
      %s53 = sshll.u32 [#allocation8], 4
      %s54 = int_to_ptr.vmem [resolvable:$true] %s53
      %59 = dma.hbm_to_vmem [thread:$0]  %s3, 1024, %s54, [#allocation9], 64, 64, 4
    $region17: #{tpu_custom_call.1} parent=1 // pred_fallthru
      _
    // Predicated region
    $region18: #{tpu_custom_call.1} parent=1 // pred_check
      _
    $region19: #{tpu_custom_call.1} parent=1 // pred_check_branch
      %61 = sbr.rel (0) target = $region21
    $region20: #{tpu_custom_call.1} parent=1 // pred_region
      _
    $region21: #{tpu_custom_call.1} parent=1 // pred_fallthru
      _
    // Predicated region
    $region22: #{tpu_custom_call.1} parent=1 // pred_check
      _
    $region23: #{tpu_custom_call.1} parent=1 // pred_check_branch
      %63 = sbr.rel (0) target = $region25
    $region24: #{tpu_custom_call.1} parent=1 // pred_region
      %64 = dma.done [#allocation3], 512
    $region25: #{tpu_custom_call.1} parent=1 // pred_fallthru
      _
    // Predicated region
    $region26: #{tpu_custom_call.1} parent=1 // pred_check
      _
    $region27: #{tpu_custom_call.1} parent=1 // pred_check_branch
      %66 = sbr.rel (0) target = $region29
    $region28: #{tpu_custom_call.1} parent=1 // pred_region
      %67 = dma.done [#allocation6], 4096
    $region29: #{tpu_custom_call.1} parent=1 // pred_fallthru
      _
    // Predicated region
    $region30: #{tpu_custom_call.1} parent=1 // pred_check
      _
    $region31: #{tpu_custom_call.1} parent=1 // pred_check_branch
      %69 = sbr.rel (0) target = $region33
    $region32: #{tpu_custom_call.1} parent=1 // pred_region
      %70 = dma.done [#allocation6], 1024
    $region33: #{tpu_custom_call.1} parent=1 // pred_fallthru
      _
    // Predicated region
    $region34: #{tpu_custom_call.1} parent=1 // pred_check
      _
    $region35: #{tpu_custom_call.1} parent=1 // pred_check_branch
      %72 = sbr.rel (0) target = $region37
    $region36: #{tpu_custom_call.1} parent=1 // pred_region
      %73 = dma.done [#allocation9], 1024
    $region37: #{tpu_custom_call.1} parent=1 // pred_fallthru
      _
    %v75 = vld [vmem:[#allocation2] sm:$0xff]
    %v76 = vld [vmem:[#allocation2 + $0x8] sm:$0xff]
    %v77 = vld [vmem:[#allocation2 + $0x10] sm:$0xff]
    %v78 = vld [vmem:[#allocation2 + $0x18] sm:$0xff]
    %v79 = vpack.c.bf16 %v75, %v75
    %v80 = vpack.c.bf16 %v76, %v76
    %v81 = vpack.c.bf16 %v77, %v77
    %v82 = vpack.c.bf16 %v78, %v78
    %v83 = vld [vmem:[#allocation5] sm:$0xf]
    %v84 = vld [vmem:[#allocation5 + $0x4] sm:$0xf]
    %v85 = vld [vmem:[#allocation5 + $0x8] sm:$0xf]
    %v86 = vld [vmem:[#allocation5 + $0xc] sm:$0xf]
    %v87 = vld [vmem:[#allocation5 + $0x10] sm:$0xf]
    %v88 = vld [vmem:[#allocation5 + $0x14] sm:$0xf]
    %v89 = vld [vmem:[#allocation5 + $0x18] sm:$0xf]
    %v90 = vld [vmem:[#allocation5 + $0x1c] sm:$0xf]
    %v91 = vld [vmem:[#allocation5 + $0x20] sm:$0xf]
    %v92 = vld [vmem:[#allocation5 + $0x24] sm:$0xf]
    %v93 = vld [vmem:[#allocation5 + $0x28] sm:$0xf]
    %v94 = vld [vmem:[#allocation5 + $0x2c] sm:$0xf]
    %v95 = vld [vmem:[#allocation5 + $0x30] sm:$0xf]
    %v96 = vld [vmem:[#allocation5 + $0x34] sm:$0xf]
    %v97 = vld [vmem:[#allocation5 + $0x38] sm:$0xf]
    %v98 = vld [vmem:[#allocation5 + $0x3c] sm:$0xf]
    %v99 = vld [vmem:[#allocation5 + $0x40] sm:$0xf]
    %v100 = vld [vmem:[#allocation5 + $0x44] sm:$0xf]
    %v101 = vld [vmem:[#allocation5 + $0x48] sm:$0xf]
    %v102 = vld [vmem:[#allocation5 + $0x4c] sm:$0xf]
    %v103 = vld [vmem:[#allocation5 + $0x50] sm:$0xf]
    %v104 = vld [vmem:[#allocation5 + $0x54] sm:$0xf]
    %v105 = vld [vmem:[#allocation5 + $0x58] sm:$0xf]
    %v106 = vld [vmem:[#allocation5 + $0x5c] sm:$0xf]
    %v107 = vld [vmem:[#allocation5 + $0x60] sm:$0xf]
    %v108 = vld [vmem:[#allocation5 + $0x64] sm:$0xf]
    %v109 = vld [vmem:[#allocation5 + $0x68] sm:$0xf]
    %v110 = vld [vmem:[#allocation5 + $0x6c] sm:$0xf]
    %v111 = vld [vmem:[#allocation5 + $0x70] sm:$0xf]
    %v112 = vld [vmem:[#allocation5 + $0x74] sm:$0xf]
    %v113 = vld [vmem:[#allocation5 + $0x78] sm:$0xf]
    %v114 = vld [vmem:[#allocation5 + $0x7c] sm:$0xf]
    %v115 = vld [vmem:[#allocation5 + $0x80] sm:$0xf]
    %v116 = vld [vmem:[#allocation5 + $0x84] sm:$0xf]
    %v117 = vld [vmem:[#allocation5 + $0x88] sm:$0xf]
    %v118 = vld [vmem:[#allocation5 + $0x8c] sm:$0xf]
    %v119 = vld [vmem:[#allocation5 + $0x90] sm:$0xf]
    %v120 = vld [vmem:[#allocation5 + $0x94] sm:$0xf]
    %v121 = vld [vmem:[#allocation5 + $0x98] sm:$0xf]
    %v122 = vld [vmem:[#allocation5 + $0x9c] sm:$0xf]
    %v123 = vld [vmem:[#allocation5 + $0xa0] sm:$0xf]
    %v124 = vld [vmem:[#allocation5 + $0xa4] sm:$0xf]
    %v125 = vld [vmem:[#allocation5 + $0xa8] sm:$0xf]
    %v126 = vld [vmem:[#allocation5 + $0xac] sm:$0xf]
    %v127 = vld [vmem:[#allocation5 + $0xb0] sm:$0xf]
    %v128 = vld [vmem:[#allocation5 + $0xb4] sm:$0xf]
    %v129 = vld [vmem:[#allocation5 + $0xb8] sm:$0xf]
    %v130 = vld [vmem:[#allocation5 + $0xbc] sm:$0xf]
    %v131 = vld [vmem:[#allocation5 + $0xc0] sm:$0xf]
    %v132 = vld [vmem:[#allocation5 + $0xc4] sm:$0xf]
    %v133 = vld [vmem:[#allocation5 + $0xc8] sm:$0xf]
    %v134 = vld [vmem:[#allocation5 + $0xcc] sm:$0xf]
    %v135 = vld [vmem:[#allocation5 + $0xd0] sm:$0xf]
    %v136 = vld [vmem:[#allocation5 + $0xd4] sm:$0xf]
    %v137 = vld [vmem:[#allocation5 + $0xd8] sm:$0xf]
    %v138 = vld [vmem:[#allocation5 + $0xdc] sm:$0xf]
    %v139 = vld [vmem:[#allocation5 + $0xe0] sm:$0xf]
    %v140 = vld [vmem:[#allocation5 + $0xe4] sm:$0xf]
    %v141 = vld [vmem:[#allocation5 + $0xe8] sm:$0xf]
    %v142 = vld [vmem:[#allocation5 + $0xec] sm:$0xf]
    %v143 = vld [vmem:[#allocation5 + $0xf0] sm:$0xf]
    %v144 = vld [vmem:[#allocation5 + $0xf4] sm:$0xf]
    %v145 = vld [vmem:[#allocation5 + $0xf8] sm:$0xf]
    %v146 = vld [vmem:[#allocation5 + $0xfc] sm:$0xf]
    %v211 = vunpack.c.l.b16 %v83
    %v212 = vunpack.c.l.b16 %v84
    %v213 = vunpack.c.l.b16 %v85
    %v214 = vunpack.c.l.b16 %v86
    %v215 = vunpack.c.l.b16 %v87
    %v216 = vunpack.c.l.b16 %v88
    %v217 = vunpack.c.l.b16 %v89
    %v218 = vunpack.c.l.b16 %v90
    %v219 = vunpack.c.l.b16 %v91
    %v220 = vunpack.c.l.b16 %v92
    %v221 = vunpack.c.l.b16 %v93
    %v222 = vunpack.c.l.b16 %v94
    %v223 = vunpack.c.l.b16 %v95
    %v224 = vunpack.c.l.b16 %v96
    %v225 = vunpack.c.l.b16 %v97
    %v226 = vunpack.c.l.b16 %v98
    %v227 = vunpack.c.l.b16 %v99
    %v228 = vunpack.c.l.b16 %v100
    %v229 = vunpack.c.l.b16 %v101
    %v230 = vunpack.c.l.b16 %v102
    %v231 = vunpack.c.l.b16 %v103
    %v232 = vunpack.c.l.b16 %v104
    %v233 = vunpack.c.l.b16 %v105
    %v234 = vunpack.c.l.b16 %v106
    %v235 = vunpack.c.l.b16 %v107
    %v236 = vunpack.c.l.b16 %v108
    %v237 = vunpack.c.l.b16 %v109
    %v238 = vunpack.c.l.b16 %v110
    %v239 = vunpack.c.l.b16 %v111
    %v240 = vunpack.c.l.b16 %v112
    %v241 = vunpack.c.l.b16 %v113
    %v242 = vunpack.c.l.b16 %v114
    %v243 = vunpack.c.l.b16 %v115
    %v244 = vunpack.c.l.b16 %v116
    %v245 = vunpack.c.l.b16 %v117
    %v246 = vunpack.c.l.b16 %v118
    %v247 = vunpack.c.l.b16 %v119
    %v248 = vunpack.c.l.b16 %v120
    %v249 = vunpack.c.l.b16 %v121
    %v250 = vunpack.c.l.b16 %v122
    %v251 = vunpack.c.l.b16 %v123
    %v252 = vunpack.c.l.b16 %v124
    %v253 = vunpack.c.l.b16 %v125
    %v254 = vunpack.c.l.b16 %v126
    %v255 = vunpack.c.l.b16 %v127
    %v256 = vunpack.c.l.b16 %v128
    %v257 = vunpack.c.l.b16 %v129
    %v258 = vunpack.c.l.b16 %v130
    %v259 = vunpack.c.l.b16 %v131
    %v260 = vunpack.c.l.b16 %v132
    %v261 = vunpack.c.l.b16 %v133
    %v262 = vunpack.c.l.b16 %v134
    %v263 = vunpack.c.l.b16 %v135
    %v264 = vunpack.c.l.b16 %v136
    %v265 = vunpack.c.l.b16 %v137
    %v266 = vunpack.c.l.b16 %v138
    %v267 = vunpack.c.l.b16 %v139
    %v268 = vunpack.c.l.b16 %v140
    %v269 = vunpack.c.l.b16 %v141
    %v270 = vunpack.c.l.b16 %v142
    %v271 = vunpack.c.l.b16 %v143
    %v272 = vunpack.c.l.b16 %v144
    %v273 = vunpack.c.l.b16 %v145
    %v274 = vunpack.c.l.b16 %v146
    %v275 = vpack.c.b16 %v212, %v211
    %v276 = vpack.c.b16 %v214, %v213
    %v277 = vpack.c.b16 %v216, %v215
    %v278 = vpack.c.b16 %v218, %v217
    %v279 = vpack.c.b16 %v220, %v219
    %v280 = vpack.c.b16 %v222, %v221
    %v281 = vpack.c.b16 %v224, %v223
    %v282 = vpack.c.b16 %v226, %v225
    %v283 = vpack.c.b16 %v228, %v227
    %v284 = vpack.c.b16 %v230, %v229
    %v285 = vpack.c.b16 %v232, %v231
    %v286 = vpack.c.b16 %v234, %v233
    %v287 = vpack.c.b16 %v236, %v235
    %v288 = vpack.c.b16 %v238, %v237
    %v289 = vpack.c.b16 %v240, %v239
    %v290 = vpack.c.b16 %v242, %v241
    %v291 = vpack.c.b16 %v244, %v243
    %v292 = vpack.c.b16 %v246, %v245
    %v293 = vpack.c.b16 %v248, %v247
    %v294 = vpack.c.b16 %v250, %v249
    %v295 = vpack.c.b16 %v252, %v251
    %v296 = vpack.c.b16 %v254, %v253
    %v297 = vpack.c.b16 %v256, %v255
    %v298 = vpack.c.b16 %v258, %v257
    %v299 = vpack.c.b16 %v260, %v259
    %v300 = vpack.c.b16 %v262, %v261
    %v301 = vpack.c.b16 %v264, %v263
    %v302 = vpack.c.b16 %v266, %v265
    %v303 = vpack.c.b16 %v268, %v267
    %v304 = vpack.c.b16 %v270, %v269
    %v305 = vpack.c.b16 %v272, %v271
    %v306 = vpack.c.b16 %v274, %v273
    %339 = vmatprep.subr.bf16.mxu0 0
    %340 = vmatpush1.bf16.msra.mxu0 %v275
    %341 = vmatprep.subr.bf16.mxu0 0
    %342 = vmatpush1.bf16.msra.mxu0 %v276
    %343 = vmatprep.subr.bf16.mxu0 0
    %344 = vmatpush1.bf16.msra.mxu0 %v277
    %345 = vmatprep.subr.bf16.mxu0 0
    %346 = vmatpush1.bf16.msra.mxu0 %v278
    %347 = vmatprep.subr.bf16.mxu0 0
    %348 = vmatpush1.bf16.msra.mxu0 %v279
    %349 = vmatprep.subr.bf16.mxu0 0
    %350 = vmatpush1.bf16.msra.mxu0 %v280
    %351 = vmatprep.subr.bf16.mxu0 0
    %352 = vmatpush1.bf16.msra.mxu0 %v281
    %353 = vmatprep.subr.bf16.mxu0 0
    %354 = vmatpush1.bf16.msra.mxu0 %v282
    %355 = vmatprep.subr.bf16.mxu0 0
    %356 = vmatpush1.bf16.msra.mxu0 %v283
    %357 = vmatprep.subr.bf16.mxu0 0
    %358 = vmatpush1.bf16.msra.mxu0 %v284
    %359 = vmatprep.subr.bf16.mxu0 0
    %360 = vmatpush1.bf16.msra.mxu0 %v285
    %361 = vmatprep.subr.bf16.mxu0 0
    %362 = vmatpush1.bf16.msra.mxu0 %v286
    %363 = vmatprep.subr.bf16.mxu0 0
    %364 = vmatpush1.bf16.msra.mxu0 %v287
    %365 = vmatprep.subr.bf16.mxu0 0
    %366 = vmatpush1.bf16.msra.mxu0 %v288
    %367 = vmatprep.subr.bf16.mxu0 0
    %368 = vmatpush1.bf16.msra.mxu0 %v289
    %369 = vmatprep.subr.bf16.mxu0 0
    %370 = vmatpush1.bf16.msra.mxu0 %v290
    %371 = vmatprep.mubr.bf16.mxu0 %v80
    %372 = vmatmul.mubr.bf16.gmra.mrb[0].mxu0 %v79
    %v373 = vpop.f32.mrb[0].mxu0
    %v374 = vadd.f32 0.0, %v373
    %v375 = vpop.f32.mrb[0].mxu0
    %v376 = vpop.f32.mrb[0].mxu0
    %v377 = vpop.f32.mrb[0].mxu0
    %378 = vdwg.mxu0
    %379 = vmatprep.subr.bf16.mxu0 0
    %380 = vmatpush1.bf16.msra.mxu0 %v291
    %381 = vmatprep.subr.bf16.mxu0 0
    %382 = vmatpush1.bf16.msra.mxu0 %v292
    %383 = vmatprep.subr.bf16.mxu0 0
    %384 = vmatpush1.bf16.msra.mxu0 %v293
    %385 = vmatprep.subr.bf16.mxu0 0
    %386 = vmatpush1.bf16.msra.mxu0 %v294
    %387 = vmatprep.subr.bf16.mxu0 0
    %388 = vmatpush1.bf16.msra.mxu0 %v295
    %389 = vmatprep.subr.bf16.mxu0 0
    %390 = vmatpush1.bf16.msra.mxu0 %v296
    %391 = vmatprep.subr.bf16.mxu0 0
    %392 = vmatpush1.bf16.msra.mxu0 %v297
    %393 = vmatprep.subr.bf16.mxu0 0
    %394 = vmatpush1.bf16.msra.mxu0 %v298
    %395 = vmatprep.subr.bf16.mxu0 0
    %396 = vmatpush1.bf16.msra.mxu0 %v299
    %397 = vmatprep.subr.bf16.mxu0 0
    %398 = vmatpush1.bf16.msra.mxu0 %v300
    %399 = vmatprep.subr.bf16.mxu0 0
    %400 = vmatpush1.bf16.msra.mxu0 %v301
    %401 = vmatprep.subr.bf16.mxu0 0
    %402 = vmatpush1.bf16.msra.mxu0 %v302
    %403 = vmatprep.subr.bf16.mxu0 0
    %404 = vmatpush1.bf16.msra.mxu0 %v303
    %405 = vmatprep.subr.bf16.mxu0 0
    %406 = vmatpush1.bf16.msra.mxu0 %v304
    %407 = vmatprep.subr.bf16.mxu0 0
    %408 = vmatpush1.bf16.msra.mxu0 %v305
    %409 = vmatprep.subr.bf16.mxu0 0
    %410 = vmatpush1.bf16.msra.mxu0 %v306
    %411 = vmatprep.mubr.bf16.mxu0 %v82
    %412 = vmatmul.mubr.bf16.gmra.mrb[0].mxu0 %v81
    %v413 = vpop.f32.mrb[0].mxu0
    %v414 = vadd.f32 %v374, %v413
    %v415 = vpop.f32.mrb[0].mxu0
    %v416 = vpop.f32.mrb[0].mxu0
    %v417 = vpop.f32.mrb[0].mxu0
    %418 = vdwg.mxu0
    %v419 = vmax.f32 %v414, 0.0
    %v420 = vpack.c.bf16 %v419, %v419
    %v421 = vld [vmem:[#allocation7] sm:$0xf]
    %v422 = vld [vmem:[#allocation7 + $0x4] sm:$0xf]
    %v423 = vld [vmem:[#allocation7 + $0x8] sm:$0xf]
    %v424 = vld [vmem:[#allocation7 + $0xc] sm:$0xf]
    %v425 = vld [vmem:[#allocation7 + $0x10] sm:$0xf]
    %v426 = vld [vmem:[#allocation7 + $0x14] sm:$0xf]
    %v427 = vld [vmem:[#allocation7 + $0x18] sm:$0xf]
    %v428 = vld [vmem:[#allocation7 + $0x1c] sm:$0xf]
    %v429 = vld [vmem:[#allocation7 + $0x20] sm:$0xf]
    %v430 = vld [vmem:[#allocation7 + $0x24] sm:$0xf]
    %v431 = vld [vmem:[#allocation7 + $0x28] sm:$0xf]
    %v432 = vld [vmem:[#allocation7 + $0x2c] sm:$0xf]
    %v433 = vld [vmem:[#allocation7 + $0x30] sm:$0xf]
    %v434 = vld [vmem:[#allocation7 + $0x34] sm:$0xf]
    %v435 = vld [vmem:[#allocation7 + $0x38] sm:$0xf]
    %v436 = vld [vmem:[#allocation7 + $0x3c] sm:$0xf]
    %v453 = vunpack.c.l.b16 %v421
    %v454 = vunpack.c.l.b16 %v422
    %v455 = vunpack.c.l.b16 %v423
    %v456 = vunpack.c.l.b16 %v424
    %v457 = vunpack.c.l.b16 %v425
    %v458 = vunpack.c.l.b16 %v426
    %v459 = vunpack.c.l.b16 %v427
    %v460 = vunpack.c.l.b16 %v428
    %v461 = vunpack.c.l.b16 %v429
    %v462 = vunpack.c.l.b16 %v430
    %v463 = vunpack.c.l.b16 %v431
    %v464 = vunpack.c.l.b16 %v432
    %v465 = vunpack.c.l.b16 %v433
    %v466 = vunpack.c.l.b16 %v434
    %v467 = vunpack.c.l.b16 %v435
    %v468 = vunpack.c.l.b16 %v436
    %v469 = vpack.c.b16 %v454, %v453
    %v470 = vpack.c.b16 %v456, %v455
    %v471 = vpack.c.b16 %v458, %v457
    %v472 = vpack.c.b16 %v460, %v459
    %v473 = vpack.c.b16 %v462, %v461
    %v474 = vpack.c.b16 %v464, %v463
    %v475 = vpack.c.b16 %v466, %v465
    %v476 = vpack.c.b16 %v468, %v467
    %485 = vmatprep.subr.bf16.mxu0 0
    %486 = vmatpush1.bf16.msra.mxu0 %v469
    %487 = vmatprep.subr.bf16.mxu0 0
    %488 = vmatpush1.bf16.msra.mxu0 %v470
    %489 = vmatprep.subr.bf16.mxu0 0
    %490 = vmatpush1.bf16.msra.mxu0 %v471
    %491 = vmatprep.subr.bf16.mxu0 0
    %492 = vmatpush1.bf16.msra.mxu0 %v472
    %493 = vmatprep.subr.bf16.mxu0 0
    %494 = vmatpush1.bf16.msra.mxu0 %v473
    %495 = vmatprep.subr.bf16.mxu0 0
    %496 = vmatpush1.bf16.msra.mxu0 %v474
    %497 = vmatprep.subr.bf16.mxu0 0
    %498 = vmatpush1.bf16.msra.mxu0 %v475
    %499 = vmatprep.subr.bf16.mxu0 0
    %500 = vmatpush1.bf16.msra.mxu0 %v476
    %501 = vmatprep.subr.bf16.mxu0 0
    %502 = vmatpush1.bf16.msra.mxu0 0
    %503 = vmatprep.subr.bf16.mxu0 0
    %504 = vmatpush1.bf16.msra.mxu0 0
    %505 = vmatprep.subr.bf16.mxu0 0
    %506 = vmatpush1.bf16.msra.mxu0 0
    %507 = vmatprep.subr.bf16.mxu0 0
    %508 = vmatpush1.bf16.msra.mxu0 0
    %509 = vmatprep.subr.bf16.mxu0 0
    %510 = vmatpush1.bf16.msra.mxu0 0
    %511 = vmatprep.subr.bf16.mxu0 0
    %512 = vmatpush1.bf16.msra.mxu0 0
    %513 = vmatprep.subr.bf16.mxu0 0
    %514 = vmatpush1.bf16.msra.mxu0 0
    %515 = vmatprep.subr.bf16.mxu0 0
    %516 = vmatpush1.bf16.msra.mxu0 0
    %517 = vmatprep.mubr.bf16.mxu0 0
    %518 = vmatmul.mubr.bf16.gmra.mrb[0].mxu0 %v420
    %v519 = vpop.f32.mrb[0].mxu0
    %v520 = vadd.f32 0.0, %v519
    %v521 = vpop.f32.mrb[0].mxu0
    %v522 = vpop.f32.mrb[0].mxu0
    %v523 = vpop.f32.mrb[0].mxu0
    %524 = vdwg.mxu0
    %v525 = vmax.f32 %v520, 0.0
    %v526 = vpack.c.bf16 %v525, %v525
    %v527 = vld [vmem:[#allocation8] sm:$0xf]
    %v528 = vld [vmem:[#allocation8 + $0x4] sm:$0xf]
    %v529 = vld [vmem:[#allocation8 + $0x8] sm:$0xf]
    %v530 = vld [vmem:[#allocation8 + $0xc] sm:$0xf]
    %v531 = vld [vmem:[#allocation8 + $0x10] sm:$0xf]
    %v532 = vld [vmem:[#allocation8 + $0x14] sm:$0xf]
    %v533 = vld [vmem:[#allocation8 + $0x18] sm:$0xf]
    %v534 = vld [vmem:[#allocation8 + $0x1c] sm:$0xf]
    %v535 = vld [vmem:[#allocation8 + $0x20] sm:$0xf]
    %v536 = vld [vmem:[#allocation8 + $0x24] sm:$0xf]
    %v537 = vld [vmem:[#allocation8 + $0x28] sm:$0xf]
    %v538 = vld [vmem:[#allocation8 + $0x2c] sm:$0xf]
    %v539 = vld [vmem:[#allocation8 + $0x30] sm:$0xf]
    %v540 = vld [vmem:[#allocation8 + $0x34] sm:$0xf]
    %v541 = vld [vmem:[#allocation8 + $0x38] sm:$0xf]
    %v542 = vld [vmem:[#allocation8 + $0x3c] sm:$0xf]
    %v543 = vld [vmem:[%s4] sm:$0x1]
    %v545 = vlaneseq
    %v546 = vshrl.u32 %v545, 7
    %v547 = vsub.s32 0, %v546
    %v548 = vrot.slane %v543, %v547
    %v566 = vunpack.c.l.b16 %v527
    %v567 = vunpack.c.l.b16 %v528
    %v568 = vunpack.c.l.b16 %v529
    %v569 = vunpack.c.l.b16 %v530
    %v570 = vunpack.c.l.b16 %v531
    %v571 = vunpack.c.l.b16 %v532
    %v572 = vunpack.c.l.b16 %v533
    %v573 = vunpack.c.l.b16 %v534
    %v574 = vunpack.c.l.b16 %v535
    %v575 = vunpack.c.l.b16 %v536
    %v576 = vunpack.c.l.b16 %v537
    %v577 = vunpack.c.l.b16 %v538
    %v578 = vunpack.c.l.b16 %v539
    %v579 = vunpack.c.l.b16 %v540
    %v580 = vunpack.c.l.b16 %v541
    %v581 = vunpack.c.l.b16 %v542
    %v582 = vpack.c.b16 %v567, %v566
    %v583 = vpack.c.b16 %v569, %v568
    %v584 = vpack.c.b16 %v571, %v570
    %v585 = vpack.c.b16 %v573, %v572
    %v586 = vpack.c.b16 %v575, %v574
    %v587 = vpack.c.b16 %v577, %v576
    %v588 = vpack.c.b16 %v579, %v578
    %v589 = vpack.c.b16 %v581, %v580
    %598 = vmatprep.subr.bf16.mxu0 0
    %599 = vmatpush1.bf16.msra.mxu0 %v582
    %600 = vmatprep.subr.bf16.mxu0 0
    %601 = vmatpush1.bf16.msra.mxu0 %v583
    %602 = vmatprep.subr.bf16.mxu0 0
    %603 = vmatpush1.bf16.msra.mxu0 %v584
    %604 = vmatprep.subr.bf16.mxu0 0
    %605 = vmatpush1.bf16.msra.mxu0 %v585
    %606 = vmatprep.subr.bf16.mxu0 0
    %607 = vmatpush1.bf16.msra.mxu0 %v586
    %608 = vmatprep.subr.bf16.mxu0 0
    %609 = vmatpush1.bf16.msra.mxu0 %v587
    %610 = vmatprep.subr.bf16.mxu0 0
    %611 = vmatpush1.bf16.msra.mxu0 %v588
    %612 = vmatprep.subr.bf16.mxu0 0
    %613 = vmatpush1.bf16.msra.mxu0 %v589
    %614 = vmatprep.subr.bf16.mxu0 0
    %615 = vmatpush1.bf16.msra.mxu0 0
    %616 = vmatprep.subr.bf16.mxu0 0
    %617 = vmatpush1.bf16.msra.mxu0 0
    %618 = vmatprep.subr.bf16.mxu0 0
    %619 = vmatpush1.bf16.msra.mxu0 0
    %620 = vmatprep.subr.bf16.mxu0 0
    %621 = vmatpush1.bf16.msra.mxu0 0
    %622 = vmatprep.subr.bf16.mxu0 0
    %623 = vmatpush1.bf16.msra.mxu0 0
    %624 = vmatprep.subr.bf16.mxu0 0
    %625 = vmatpush1.bf16.msra.mxu0 0
    %626 = vmatprep.subr.bf16.mxu0 0
    %627 = vmatpush1.bf16.msra.mxu0 0
    %628 = vmatprep.subr.bf16.mxu0 0
    %629 = vmatpush1.bf16.msra.mxu0 0
    %630 = vmatprep.mubr.bf16.mxu0 0
    %631 = vmatmul.mubr.bf16.gmra.mrb[0].mxu0 %v526
    %v632 = vpop.f32.mrb[0].mxu0
    %v633 = vadd.f32 %v548, %v632
    %v634 = vpop.f32.mrb[0].mxu0
    %v635 = vpop.f32.mrb[0].mxu0
    %v636 = vpop.f32.mrb[0].mxu0
    %637 = vdwg.mxu0
    %638 = vst [vmem:[#allocation10] sm:$0xff] %v633
    // Predicated region
    $region38: #{tpu_custom_call.1} parent=1 // pred_check
      _
    $region39: #{tpu_custom_call.1} parent=1 // pred_check_branch
      %640 = sbr.rel (0) target = $region41
    $region40: #{tpu_custom_call.1} parent=1 // pred_region
      %s642 = ssub.s32 128, 128
      %643 = vsyncadd [#allocation4], %s642
      %s645 = sshll.u32 [#allocation10], 4
      %s646 = int_to_ptr.vmem [resolvable:$true] %s645
      %648 = dma.vmem_to_hbm [thread:$0]  %s646, 128, %s5, [#allocation4]
    $region41: #{tpu_custom_call.1} parent=1 // pred_fallthru
      _
    // Predicated region
    $region42: #{tpu_custom_call.1} parent=1 // pred_check
      _
    $region43: #{tpu_custom_call.1} parent=1 // pred_check_branch
      %650 = sbr.rel (0) target = $region45
    $region44: #{tpu_custom_call.1} parent=1 // pred_region
      %651 = dma.done [#allocation4], 128
    $region45: #{tpu_custom_call.1} parent=1 // pred_fallthru
      _
    %652 = vsyncpa [#allocation3], 1
    %653 = vsyncpa [#allocation6], 1
    %654 = vsyncpa [#allocation9], 1
    %655 = vsyncpa [#allocation4], 1

</llo_original>
